<compile_context>
chip_gen: v5e
topology: v5e:2x2
jax: 0.10.0
libtpu: 0.0.40
codegen_flags: <defaults>
</compile_context>

<pallas_src>
import numpy as np
import jax
import jax.numpy as jnp
from jax.experimental import pallas as pl
from jax.experimental.pallas import tpu as pltpu

_SUBLANE = 8    # f32 sublane granule
_LANE = 128     # lane width


def _round_up(n, m):
    return ((n + m - 1) // m) * m


def rnn_cell_kernel(x_ref, h_ref, w_ih_ref, w_hh_ref, b_ref, out_ref):
    # Two small MXU pushes (f32 accumulate) + VPU bias add + EUP tanh,
    # lane-dense (H_pad = multiple of 128) store.
    acc = jnp.dot(x_ref[...], w_ih_ref[...], preferred_element_type=jnp.float32)
    acc = acc + jnp.dot(h_ref[...], w_hh_ref[...],
                        preferred_element_type=jnp.float32)

    tb = acc.shape[0]           # static batch rows of this block
    nb = b_ref.shape[0]         # bias was pre-broadcast to _SUBLANE rows
    if tb == nb:
        bias = b_ref[...]                                   # plain VPU add
    elif tb < nb:
        bias = b_ref[0:tb, :]                               # static sub-view
    else:
        bias = jnp.broadcast_to(b_ref[0:1, :], acc.shape)   # big-tile path

    out_ref[...] = jnp.tanh(acc + bias).astype(out_ref.dtype)


def prepare_rnn_cell_params(weight_ih, weight_hh, bias_ih, bias_hh):
    """One-time parameter prep (cached alongside the module).

    Pads H to a multiple of 128 (lane-dense output, zero-padding is exact on
    real lanes), keeps the contracting dims untouched so x / prev_h need no
    per-call padding, folds the two biases and pre-broadcasts them to the
    sublane granule so the in-kernel add stays on the VPU."""
    in_size, hidden = weight_ih.shape
    h_pad = _round_up(hidden, _LANE)

    w_ih_p = jnp.pad(weight_ih, ((0, 0), (0, h_pad - hidden)))   # [in, H_pad]
    w_hh_p = jnp.pad(weight_hh, ((0, 0), (0, h_pad - hidden)))   # [hid, H_pad]

    b = (bias_ih + bias_hh).reshape(1, hidden)                   # fold biases
    b = jnp.pad(b, ((0, 0), (0, h_pad - hidden)))                # [1, H_pad]
    b = jnp.asarray(jnp.broadcast_to(b, (_SUBLANE, h_pad)))      # [8, H_pad]
    return w_ih_p, w_hh_p, b


def rnn_cell_forward(x, prev_h, w_ih_p, w_hh_p, b_p, *, max_batch_tile=256):
    B, in_size = x.shape
    _, hidden = prev_h.shape
    h_pad = w_ih_p.shape[1]

    if B <= max_batch_tile:
        # Single batch block: block_shape == full array dims, so no
        # wrapper-side data movement at all before the kernel.
        tb, b_pad = B, B
    else:
        # Large batch: tile the batch axis ('parallel' -> shards across v7x's
        # 2 TensorCores, restores double-buffered xh-tile DMA overlap).
        tb = max_batch_tile                      # multiple of 8
        b_pad = _round_up(B, tb)
        x = jnp.pad(x, ((0, b_pad - B), (0, 0)))
        prev_h = jnp.pad(prev_h, ((0, b_pad - B), (0, 0)))

    n_blocks = b_pad // tb

    cost = pl.CostEstimate(
        flops=2 * b_pad * (in_size + hidden) * h_pad,
        transcendentals=b_pad * h_pad,
        bytes_accessed=4 * (x.size + prev_h.size + w_ih_p.size + w_hh_p.size
                            + b_p.size + b_pad * h_pad),
    )

    out_pad = pl.pallas_call(
        rnn_cell_kernel,
        out_shape=jax.ShapeDtypeStruct((b_pad, h_pad), x.dtype),
        grid=(n_blocks,),
        in_specs=[
            pl.BlockSpec((tb, in_size), lambda i: (i, 0)),
            pl.BlockSpec((tb, hidden), lambda i: (i, 0)),
            pl.BlockSpec(w_ih_p.shape, lambda i: (0, 0)),   # resident weights
            pl.BlockSpec(w_hh_p.shape, lambda i: (0, 0)),   # resident weights
            pl.BlockSpec(b_p.shape, lambda i: (0, 0)),      # resident bias
        ],
        out_specs=pl.BlockSpec((tb, h_pad), lambda i: (i, 0)),
        compiler_params=pltpu.CompilerParams(
            dimension_semantics=("parallel",)),
        cost_estimate=cost,
    )(x, prev_h, w_ih_p, w_hh_p, b_p)

    # Strip the H padding (and any batch padding) back off.
    return out_pad[:B, :hidden]


def rnn_cell_reference(x, prev_h, weight_ih, weight_hh, bias_ih, bias_hh):
    return jnp.tanh(x @ weight_ih + prev_h @ weight_hh + bias_ih + bias_hh)


if __name__ == "__main__":
    input_size = 16
    hidden_size = 32
    batch = 2

    key = jax.random.PRNGKey(0)
    k_x, k_h, k_wih, k_whh, k_bih, k_bhh, k_xb, k_hb = jax.random.split(key, 8)

    # Deterministic parameter init mirroring reset_parameters():
    # uniform(-stdv, stdv) with stdv = 1/sqrt(hidden_size).
    stdv = 1.0 / np.sqrt(hidden_size)
    weight_ih = jax.random.uniform(
        k_wih, (input_size, hidden_size), jnp.float32, -stdv, stdv)
    weight_hh = jax.random.uniform(
        k_whh, (hidden_size, hidden_size), jnp.float32, -stdv, stdv)
    bias_ih = jax.random.uniform(k_bih, (hidden_size,), jnp.float32, -stdv, stdv)
    bias_hh = jax.random.uniform(k_bhh, (hidden_size,), jnp.float32, -stdv, stdv)

    x = jax.random.normal(k_x, (batch, input_size), jnp.float32)
    prev_h = jax.random.normal(k_h, (batch, hidden_size), jnp.float32)

    # One-time parameter prep (cached alongside the module).
    w_ih_p, w_hh_p, b_p = prepare_rnn_cell_params(
        weight_ih, weight_hh, bias_ih, bias_hh)

    # --- small-batch path (single block, zero wrapper-side data movement) ---
    out = rnn_cell_forward(x, prev_h, w_ih_p, w_hh_p, b_p)
    out = jax.block_until_ready(out)
    ref = rnn_cell_reference(x, prev_h, weight_ih, weight_hh, bias_ih, bias_hh)
    np.testing.assert_allclose(np.asarray(out), np.asarray(ref),
                               rtol=1e-5, atol=1e-5)

    # --- batch-tiled path (grid over batch, resident weights/bias) ---
    big_batch = 130
    xb = jax.random.normal(k_xb, (big_batch, input_size), jnp.float32)
    hb = jax.random.normal(k_hb, (big_batch, hidden_size), jnp.float32)
    out_b = rnn_cell_forward(xb, hb, w_ih_p, w_hh_p, b_p, max_batch_tile=64)
    out_b = jax.block_until_ready(out_b)
    ref_b = rnn_cell_reference(xb, hb, weight_ih, weight_hh, bias_ih, bias_hh)
    np.testing.assert_allclose(np.asarray(out_b), np.asarray(ref_b),
                               rtol=1e-5, atol=1e-5)

    print("KERNEL_OK")
</pallas_src>

<mosaic_0001>
module attributes {stable_mosaic.version = 11 : i64} {
  func.func @rnn_cell_kernel(%arg0: i32, %arg1: memref<2x16xf32, #tpu.memory_space<vmem>>, %arg2: memref<2x32xf32, #tpu.memory_space<vmem>>, %arg3: memref<16x128xf32, #tpu.memory_space<vmem>>, %arg4: memref<32x128xf32, #tpu.memory_space<vmem>>, %arg5: memref<8x128xf32, #tpu.memory_space<vmem>>, %arg6: memref<2x128xf32, #tpu.memory_space<vmem>>) attributes {dimension_semantics = [#tpu.dimension_semantics<parallel>], iteration_bounds = array<i64: 1>, scalar_prefetch = 0 : i64, scratch_operands = 0 : i64, tpu.core_type = #tpu.core_type<tc>, window_params = [{transform_indices = @transform_0, window_bounds = array<i64: 2, 16>}, {transform_indices = @transform_1, window_bounds = array<i64: 2, 32>}, {pipeline_mode = #tpu.pipeline_mode<synchronous>, transform_indices = @transform_2, window_bounds = array<i64: 16, 128>}, {pipeline_mode = #tpu.pipeline_mode<synchronous>, transform_indices = @transform_3, window_bounds = array<i64: 32, 128>}, {pipeline_mode = #tpu.pipeline_mode<synchronous>, transform_indices = @transform_4, window_bounds = array<i64: 8, 128>}, {transform_indices = @transform_5, window_bounds = array<i64: 2, 128>}]} {
    %c0 = arith.constant 0 : index
    %c0_0 = arith.constant 0 : index
    %0 = vector.load %arg1[%c0, %c0_0] : memref<2x16xf32, #tpu.memory_space<vmem>>, vector<2x16xf32>
    %c0_1 = arith.constant 0 : index
    %c0_2 = arith.constant 0 : index
    %1 = vector.load %arg3[%c0_1, %c0_2] : memref<16x128xf32, #tpu.memory_space<vmem>>, vector<16x128xf32>
    %cst = arith.constant dense<0.000000e+00> : vector<2x128xf32>
    %2 = tpu.matmul %0, %1, %cst {dimension_numbers = #tpu.dot_dimension_numbers<[1], [0], [0], [1], [0, 0, 1, 1], [], []>} : vector<2x16xf32>, vector<16x128xf32>, vector<2x128xf32> -> vector<2x128xf32>
    %c0_3 = arith.constant 0 : index
    %c0_4 = arith.constant 0 : index
    %3 = vector.load %arg2[%c0_3, %c0_4] : memref<2x32xf32, #tpu.memory_space<vmem>>, vector<2x32xf32>
    %c0_5 = arith.constant 0 : index
    %c0_6 = arith.constant 0 : index
    %4 = vector.load %arg4[%c0_5, %c0_6] : memref<32x128xf32, #tpu.memory_space<vmem>>, vector<32x128xf32>
    %cst_7 = arith.constant dense<0.000000e+00> : vector<2x128xf32>
    %5 = tpu.matmul %3, %4, %cst_7 {dimension_numbers = #tpu.dot_dimension_numbers<[1], [0], [0], [1], [0, 0, 1, 1], [], []>} : vector<2x32xf32>, vector<32x128xf32>, vector<2x128xf32> -> vector<2x128xf32>
    %6 = arith.addf %2, %5 : vector<2x128xf32>
    %c0_8 = arith.constant 0 : index
    %c0_9 = arith.constant 0 : index
    %7 = vector.load %arg5[%c0_8, %c0_9] : memref<8x128xf32, #tpu.memory_space<vmem>>, vector<2x128xf32>
    %8 = arith.addf %6, %7 : vector<2x128xf32>
    %9 = math.tanh %8 : vector<2x128xf32>
    %c0_10 = arith.constant 0 : index
    %c0_11 = arith.constant 0 : index
    %10 = vector.load %arg6[%c0_10, %c0_11] : memref<2x128xf32, #tpu.memory_space<vmem>>, vector<2x128xf32>
    tpu.vector_store %arg6[%c0_10, %c0_11], %9 {strides = array<i32>} : memref<2x128xf32, #tpu.memory_space<vmem>>, vector<2x128xf32>,
    return
  }
  func.func @transform_0(%arg0: i32) -> (i32, i32) {
    %c0_i32 = arith.constant 0 : i32
    %c0_i32_0 = arith.constant 0 : i32
    return %arg0, %c0_i32 : i32, i32
  }
  func.func @transform_1(%arg0: i32) -> (i32, i32) {
    %c0_i32 = arith.constant 0 : i32
    %c0_i32_0 = arith.constant 0 : i32
    return %arg0, %c0_i32 : i32, i32
  }
  func.func @transform_2(%arg0: i32) -> (i32, i32) {
    %c0_i32 = arith.constant 0 : i32
    %c0_i32_0 = arith.constant 0 : i32
    %c0_i32_1 = arith.constant 0 : i32
    return %c0_i32, %c0_i32_0 : i32, i32
  }
  func.func @transform_3(%arg0: i32) -> (i32, i32) {
    %c0_i32 = arith.constant 0 : i32
    %c0_i32_0 = arith.constant 0 : i32
    %c0_i32_1 = arith.constant 0 : i32
    return %c0_i32, %c0_i32_0 : i32, i32
  }
  func.func @transform_4(%arg0: i32) -> (i32, i32) {
    %c0_i32 = arith.constant 0 : i32
    %c0_i32_0 = arith.constant 0 : i32
    %c0_i32_1 = arith.constant 0 : i32
    return %c0_i32, %c0_i32_0 : i32, i32
  }
  func.func @transform_5(%arg0: i32) -> (i32, i32) {
    %c0_i32 = arith.constant 0 : i32
    %c0_i32_0 = arith.constant 0 : i32
    return %arg0, %c0_i32 : i32, i32
  }
}

</mosaic_0001>

<llo_original>
// kernel: tpu_custom_call.1
$region0: #{tpu_custom_call.1}
  #allocation0 [shape = 'u32[]', space=smem, size = 0x4, offset = 0x4, fixed_abs, tag = 'smem constant byte address 0x4 - core index']
  #allocation1 [shape = 'u32[72,128]{1,0:T(1,128)}', space=vmem, size = 0x9000, scoped, tag = 'internal scratch']
  %s0 = inlined_call_operand.hbm [shape: f32[2,16], index: 0, kind: input, shape index: {}]
  %s1 = inlined_call_operand.hbm [shape: f32[2,32], index: 1, kind: input, shape index: {}]
  %s2 = inlined_call_operand.hbm [shape: f32[16,128], index: 2, kind: input, shape index: {}]
  %s3 = inlined_call_operand.hbm [shape: f32[32,128], index: 3, kind: input, shape index: {}]
  %s4 = inlined_call_operand.hbm [shape: f32[8,128], index: 4, kind: input, shape index: {}]
  %s5 = inlined_call_operand.hbm [shape: f32[2,128], index: 5, kind: output, shape index: {}]
  %s6 = sld [smem:[#allocation0]]
  $region50: #{tpu_custom_call.1} parent=0
    _
  %s8 = ssub.s32 1, %s6
  %s9 = scalar_select 0, %s8, %s6
  $region1: #{tpu_custom_call.1} parent=0
    #allocation2 [shape = 'u8[1024]{0}', space=vmem, size = 0x400, scoped, tag = 'input window, operand 0, single buffered']
    #allocation3 [shape = 's32[1]{0}', space=sflag, size = 0x4, scoped, tag = 'scoped memory for tpu_custom_call.1']
    #allocation4 [shape = 's32[1]{0}', space=sflag, size = 0x4, scoped, tag = 'scoped memory for tpu_custom_call.1']
    #allocation5 [shape = 'u8[1024]{0}', space=vmem, size = 0x400, scoped, tag = 'input window, operand 1, single buffered']
    #allocation6 [shape = 's32[1]{0}', space=sflag, size = 0x4, scoped, tag = 'scoped memory for tpu_custom_call.1']
    #allocation7 [shape = 'u8[8192]{0}', space=vmem, size = 0x2000, scoped, tag = 'input window, operand 2, single buffered']
    #allocation8 [shape = 'u8[16384]{0}', space=vmem, size = 0x4000, scoped, tag = 'input window, operand 3, single buffered']
    #allocation9 [shape = 's32[1]{0}', space=sflag, size = 0x4, scoped, tag = 'scoped memory for tpu_custom_call.1']
    #allocation10 [shape = 'u8[4096]{0}', space=vmem, size = 0x1000, scoped, tag = 'input window, operand 4, single buffered']
    #allocation11 [shape = 'u8[1024]{0}', space=vmem, size = 0x400, scoped, tag = 'output window, operand 0, single buffered']
    %10 = vsyncpa [#allocation3], 0
    %11 = vsyncpa [#allocation6], 0
    %12 = vsyncpa [#allocation9], 0
    %13 = vsyncpa [#allocation4], 0
    // Predicated region
    $region2: #{tpu_custom_call.1} parent=1 // pred_check
      _
    $region3: #{tpu_custom_call.1} parent=1 // pred_check_branch
      %15 = sbr.rel (0) target = $region5
    $region4: #{tpu_custom_call.1} parent=1 // pred_region
      %17 = vsyncadd [#allocation3], 0
      %s19 = sshll.u32 %s0, 4
      %s20 = int_to_ptr.hbm [resolvable:$true] %s19
      %s21 = sshll.u32 [#allocation2], 4
      %s22 = int_to_ptr.vmem [resolvable:$true] %s21
      %24 = dma.hbm_to_vmem [thread:$0]  %s20, 32, %s22, [#allocation3]
    $region5: #{tpu_custom_call.1} parent=1 // pred_fallthru
      _
    // Predicated region
    $region6: #{tpu_custom_call.1} parent=1 // pred_check
      _
    $region7: #{tpu_custom_call.1} parent=1 // pred_check_branch
      %26 = sbr.rel (0) target = $region9
    $region8: #{tpu_custom_call.1} parent=1 // pred_region
      %28 = vsyncadd [#allocation6], 0
      %s30 = sshll.u32 %s1, 4
      %s31 = int_to_ptr.hbm [resolvable:$true] %s30
      %s32 = sshll.u32 [#allocation5], 4
      %s33 = int_to_ptr.vmem [resolvable:$true] %s32
      %35 = dma.hbm_to_vmem [thread:$0]  %s31, 32, %s33, [#allocation6]
    $region9: #{tpu_custom_call.1} parent=1 // pred_fallthru
      _
    // Predicated region
    $region10: #{tpu_custom_call.1} parent=1 // pred_check
      _
    $region11: #{tpu_custom_call.1} parent=1 // pred_check_branch
      %37 = sbr.rel (0) target = $region13
    $region12: #{tpu_custom_call.1} parent=1 // pred_region
      %39 = vsyncadd [#allocation6], 0
      %s40 = sshll.u32 %s2, 4
      %s41 = int_to_ptr.hbm [resolvable:$true] %s40
      %s42 = sshll.u32 [#allocation7], 4
      %s43 = int_to_ptr.vmem [resolvable:$true] %s42
      %48 = dma.hbm_to_vmem [thread:$0]  %s41, 256, %s43, [#allocation6], 128, 128, 8
    $region13: #{tpu_custom_call.1} parent=1 // pred_fallthru
      _
    // Predicated region
    $region14: #{tpu_custom_call.1} parent=1 // pred_check
      _
    $region15: #{tpu_custom_call.1} parent=1 // pred_check_branch
      %50 = sbr.rel (0) target = $region17
    $region16: #{tpu_custom_call.1} parent=1 // pred_region
      %52 = vsyncadd [#allocation9], 0
      %s53 = sshll.u32 %s3, 4
      %s54 = int_to_ptr.hbm [resolvable:$true] %s53
      %s55 = sshll.u32 [#allocation8], 4
      %s56 = int_to_ptr.vmem [resolvable:$true] %s55
      %61 = dma.hbm_to_vmem [thread:$0]  %s54, 512, %s56, [#allocation9], 128, 128, 8
    $region17: #{tpu_custom_call.1} parent=1 // pred_fallthru
      _
    // Predicated region
    $region18: #{tpu_custom_call.1} parent=1 // pred_check
      _
    $region19: #{tpu_custom_call.1} parent=1 // pred_check_branch
      %63 = sbr.rel (0) target = $region21
    $region20: #{tpu_custom_call.1} parent=1 // pred_region
      %65 = vsyncadd [#allocation9], 0
      %s67 = sshll.u32 %s4, 4
      %s68 = int_to_ptr.hbm [resolvable:$true] %s67
      %s69 = sshll.u32 [#allocation10], 4
      %s70 = int_to_ptr.vmem [resolvable:$true] %s69
      %72 = dma.hbm_to_vmem [thread:$0]  %s68, 128, %s70, [#allocation9]
    $region21: #{tpu_custom_call.1} parent=1 // pred_fallthru
      _
    // Predicated region
    $region22: #{tpu_custom_call.1} parent=1 // pred_check
      _
    $region23: #{tpu_custom_call.1} parent=1 // pred_check_branch
      %74 = sbr.rel (0) target = $region25
    $region24: #{tpu_custom_call.1} parent=1 // pred_region
      %76 = dma.done [#allocation3], 32
    $region25: #{tpu_custom_call.1} parent=1 // pred_fallthru
      _
    // Predicated region
    $region26: #{tpu_custom_call.1} parent=1 // pred_check
      _
    $region27: #{tpu_custom_call.1} parent=1 // pred_check_branch
      %78 = sbr.rel (0) target = $region29
    $region28: #{tpu_custom_call.1} parent=1 // pred_region
      %80 = dma.done [#allocation6], 32
    $region29: #{tpu_custom_call.1} parent=1 // pred_fallthru
      _
    // Predicated region
    $region30: #{tpu_custom_call.1} parent=1 // pred_check
      _
    $region31: #{tpu_custom_call.1} parent=1 // pred_check_branch
      %82 = sbr.rel (0) target = $region33
    $region32: #{tpu_custom_call.1} parent=1 // pred_region
      %84 = dma.done [#allocation6], 256
    $region33: #{tpu_custom_call.1} parent=1 // pred_fallthru
      _
    // Predicated region
    $region34: #{tpu_custom_call.1} parent=1 // pred_check
      _
    $region35: #{tpu_custom_call.1} parent=1 // pred_check_branch
      %86 = sbr.rel (0) target = $region37
    $region36: #{tpu_custom_call.1} parent=1 // pred_region
      %88 = dma.done [#allocation9], 512
    $region37: #{tpu_custom_call.1} parent=1 // pred_fallthru
      _
    // Predicated region
    $region38: #{tpu_custom_call.1} parent=1 // pred_check
      _
    $region39: #{tpu_custom_call.1} parent=1 // pred_check_branch
      %90 = sbr.rel (0) target = $region41
    $region40: #{tpu_custom_call.1} parent=1 // pred_region
      %92 = dma.done [#allocation9], 128
    $region41: #{tpu_custom_call.1} parent=1 // pred_fallthru
      _
    %v93 = vld [vmem:[#allocation2] sm:$0x3]
    %v94 = vld [vmem:[#allocation7] sm:$0xff]
    %v95 = vld [vmem:[#allocation7 + $0x8] sm:$0xff]
    %v96 = vld [vmem:[#allocation5] sm:$0x3]
    %v97 = vld [vmem:[#allocation8] sm:$0xff]
    %v98 = vld [vmem:[#allocation8 + $0x8] sm:$0xff]
    %v99 = vld [vmem:[#allocation8 + $0x10] sm:$0xff]
    %v100 = vld [vmem:[#allocation8 + $0x18] sm:$0xff]
    %vm101 = vcmask 261120
    %v103 = vsel %vm101, %v96, 0
    %105 = vmatpush.msra.mxu0 0.0
    %106 = vmatpush.msra.mxu0 0.0
    %107 = vmatpush.msra.mxu0 0.0
    %108 = vmatpush.msra.mxu0 0.0
    %109 = vmatpush.msra.mxu0 0.0
    %110 = vmatpush.msra.mxu0 0.0
    %111 = vmatpush.msra.mxu0 0.0
    %112 = vmatpush.msra.mxu0 0.0
    %113 = vmatpush.msra.mxu0 0.0
    %114 = vmatpush.msra.mxu0 0.0
    %115 = vmatpush.msra.mxu0 0.0
    %116 = vmatpush.msra.mxu0 0.0
    %117 = vmatpush.msra.mxu0 %v100
    %118 = vmatpush.msra.mxu0 %v99
    %119 = vmatpush.msra.mxu0 %v98
    %120 = vmatpush.msra.mxu0 %v97
    %121 = vmatmul.f32.gmra.mxu0 %v103
    %v122 = vpop.f32.mrf.mxu0
    %v123 = vadd.f32 0.0, %v122
    %124 = vdwg.mxu0
    %vm125 = vcmask 130048
    %v127 = vsel %vm125, %v93, 0
    %129 = vmatpush.msra.mxu0 0.0
    %130 = vmatpush.msra.mxu0 0.0
    %131 = vmatpush.msra.mxu0 0.0
    %132 = vmatpush.msra.mxu0 0.0
    %133 = vmatpush.msra.mxu0 0.0
    %134 = vmatpush.msra.mxu0 0.0
    %135 = vmatpush.msra.mxu0 0.0
    %136 = vmatpush.msra.mxu0 0.0
    %137 = vmatpush.msra.mxu0 0.0
    %138 = vmatpush.msra.mxu0 0.0
    %139 = vmatpush.msra.mxu0 0.0
    %140 = vmatpush.msra.mxu0 0.0
    %141 = vmatpush.msra.mxu0 0.0
    %142 = vmatpush.msra.mxu0 0.0
    %143 = vmatpush.msra.mxu0 %v95
    %144 = vmatpush.msra.mxu0 %v94
    %145 = vmatmul.f32.gmra.mxu0 %v127
    %v146 = vpop.f32.mrf.mxu0
    %v147 = vadd.f32 %v123, %v146
    %148 = vdwg.mxu0
    %v149 = vld [vmem:[#allocation10] sm:$0x3]
    %v150 = vadd.f32 %v147, %v149
    %v151 = vtanh.pop %v150
    %152 = vst [vmem:[#allocation11] sm:$0x3] %v151
    // Predicated region
    $region42: #{tpu_custom_call.1} parent=1 // pred_check
      _
    $region43: #{tpu_custom_call.1} parent=1 // pred_check_branch
      %154 = sbr.rel (0) target = $region45
    $region44: #{tpu_custom_call.1} parent=1 // pred_region
      %156 = vsyncadd [#allocation4], 0
      %s158 = sshll.u32 [#allocation11], 4
      %s159 = int_to_ptr.vmem [resolvable:$true] %s158
      %s160 = sshll.u32 %s5, 4
      %s161 = int_to_ptr.hbm [resolvable:$true] %s160
      %163 = dma.vmem_to_hbm [thread:$0]  %s159, 32, %s161, [#allocation4]
    $region45: #{tpu_custom_call.1} parent=1 // pred_fallthru
      _
    // Predicated region
    $region46: #{tpu_custom_call.1} parent=1 // pred_check
      _
    $region47: #{tpu_custom_call.1} parent=1 // pred_check_branch
      %165 = sbr.rel (0) target = $region49
    $region48: #{tpu_custom_call.1} parent=1 // pred_region
      %167 = dma.done [#allocation4], 32
    $region49: #{tpu_custom_call.1} parent=1 // pred_fallthru
      _
    %168 = vsyncpa [#allocation3], 1
    %169 = vsyncpa [#allocation6], 1
    %170 = vsyncpa [#allocation9], 1
    %171 = vsyncpa [#allocation4], 1

</llo_original>
